<compile_context>
chip_gen: v7x
topology: tpu7x:2x2x1
jax: 0.10.0
libtpu: 0.0.40
codegen_flags: <defaults>
</compile_context>

<pallas_src>
import functools

import jax
import jax.numpy as jnp
from jax import lax
from jax.experimental import pallas as pl
from jax.experimental.pallas import tpu as pltpu


def _round_up(x, m):
    return (x + m - 1) // m * m


# --------------------------------------------------------------------------
# Pass 1: conv tile (single MXU matmul) -> per-tile channel sum / sum-of-sq
# (the conv result itself is discarded; it is recomputed in pass 2)
# --------------------------------------------------------------------------
def _stats_kernel(lhs_ref, w_ref, stats_ref):
    """lhs_ref  : (TILE_M, Kdim)   im2col LHS tile
       w_ref    : (Kdim, Cout)     flattened conv weight (resident)
       stats_ref: (1, 2, Cout)     row 0 = sum, row 1 = sum of squares (tile)
    """
    conv = jnp.dot(lhs_ref[...], w_ref[...], preferred_element_type=jnp.float32)
    s0 = jnp.sum(conv, axis=0, keepdims=True)          # (1, Cout)
    s1 = jnp.sum(conv * conv, axis=0, keepdims=True)   # (1, Cout)
    stats_ref[...] = jnp.concatenate([s0, s1], axis=0).reshape(stats_ref.shape)


# --------------------------------------------------------------------------
# Pass 2: recompute conv tile + folded BN (y = conv*scale + shift) + LeakyReLU
# --------------------------------------------------------------------------
def _conv_bn_act_kernel(lhs_ref, w_ref, scale_ref, shift_ref, o_ref, *, neg_slope):
    conv = jnp.dot(lhs_ref[...], w_ref[...], preferred_element_type=jnp.float32)
    y = conv * scale_ref[...] + shift_ref[...]
    o_ref[...] = jnp.where(y > 0, y, neg_slope * y)


# --------------------------------------------------------------------------
# Public wrapper (NCHW in / NCHW out, matches CBA.forward with training-mode BN)
# --------------------------------------------------------------------------
def cba_forward(x_nchw, weight_oihw, bias, gamma, beta, *,
                stride=1, eps=1e-5, neg_slope=0.01, tile_m=1024,
                use_bf16_inputs=False):
    del bias  # exact no-op under training-mode BatchNorm (cancelled by -mean)
    n, cin, h, w = x_nchw.shape
    cout, cin_w, k, k2 = weight_oihw.shape
    assert cin == cin_w and k == k2
    assert k % 2 == 1, "padding = k//2 'same' formula assumes an odd kernel"
    pad = k // 2
    ho = (h + 2 * pad - k) // stride + 1
    wo = (w + 2 * pad - k) // stride + 1
    m = n * ho * wo
    kdim = k * k * cin

    # ---- glue: NCHW -> NHWC, zero-pad spatially, im2col (unpadded K dim) ---
    # TODO(synk): building the im2col tile inside pass 1 from a halo'd NHWC
    # input block (manual make_async_copy) would cut LHS HBM reads another ~9x.
    x = jnp.transpose(x_nchw, (0, 2, 3, 1)).astype(jnp.float32)
    xp = jnp.pad(x, ((0, 0), (pad, pad), (pad, pad), (0, 0)))
    taps = []
    for kh in range(k):
        for kw in range(k):
            taps.append(lax.slice(
                xp,
                (0, kh, kw, 0),
                (n, kh + (ho - 1) * stride + 1, kw + (wo - 1) * stride + 1, cin),
                (1, stride, stride, 1)))                      # (N, Ho, Wo, Cin)
    lhs = jnp.concatenate(taps, axis=-1).reshape(m, kdim)     # (M, k*k*Cin)

    # OIHW -> (kh, kw, cin) x cout flattening, matching the tap concat order.
    w2d = jnp.transpose(weight_oihw, (2, 3, 1, 0)).reshape(kdim, cout)
    w2d = w2d.astype(jnp.float32)

    # ---- tile_m selection --------------------------------------------------
    tile_m = max(8, _round_up(tile_m, 8))
    if m > 8:
        # at least 2 tiles so the "parallel" M axis feeds both v7x TensorCores
        tile_m = min(tile_m, _round_up(pl.cdiv(m, 2), 8))

    def _ws_bytes(t):  # rough double-buffered working set (f32, conservative)
        return 4 * (2 * t * kdim + 2 * t * cout + kdim * cout + 4 * cout)

    vmem_budget = 24 * 1024 * 1024      # leave headroom under 32 MiB scoped
    while tile_m > 8 and _ws_bytes(tile_m) > vmem_budget:
        tile_m = max(8, _round_up(tile_m // 2, 8))

    m_pad = _round_up(m, tile_m)
    num_tiles = m_pad // tile_m
    if m_pad > m:
        # zero rows: conv(0) = 0 (bias dropped) -> contribute 0 to sum/sumsq
        lhs = jnp.pad(lhs, ((0, m_pad - m), (0, 0)))

    in_dtype = jnp.bfloat16 if use_bf16_inputs else jnp.float32
    itemsize = 2 if use_bf16_inputs else 4
    lhs_k = lhs.astype(in_dtype)
    w_k = w2d.astype(in_dtype)

    cparams = pltpu.CompilerParams(dimension_semantics=("parallel",),
                                   vmem_limit_bytes=32 * 1024 * 1024)

    # ---- pass 1: per-tile channel stats ------------------------------------
    flops1 = int(2 * m_pad * kdim * cout + 3 * m_pad * cout)
    bytes1 = int((m_pad * kdim + kdim * cout) * itemsize
                 + num_tiles * 2 * cout * 4)
    # If xprof shows exposed DMA, add pipeline_mode=pl.Buffered(3) to the LHS
    # BlockSpec below (VMEM headroom is ample at these tile sizes).
    stats = pl.pallas_call(
        _stats_kernel,
        out_shape=jax.ShapeDtypeStruct((num_tiles, 2, cout), jnp.float32),
        grid_spec=pltpu.PrefetchScalarGridSpec(
            num_scalar_prefetch=0,
            grid=(num_tiles,),
            in_specs=[pl.BlockSpec((tile_m, kdim), lambda i: (i, 0)),
                      pl.BlockSpec((kdim, cout), lambda i: (0, 0))],
            out_specs=pl.BlockSpec((1, 2, cout), lambda i: (i, 0, 0))),
        compiler_params=cparams,
        cost_estimate=pl.CostEstimate(flops=flops1, transcendentals=0,
                                      bytes_accessed=bytes1),
    )(lhs_k, w_k)

    # ---- tiny stats reduction + fold BN affine into scale/shift (O(Cout)) --
    sum_c = jnp.sum(stats[:, 0, :], axis=0)                  # (Cout,)
    sumsq_c = jnp.sum(stats[:, 1, :], axis=0)                # (Cout,)
    mean = sum_c / m
    # NOTE: E[x^2]-E[x]^2 in f32 can cancel when |mean| >> std; fine at these
    # scales (matches reference to <1e-4).  A shifted / Welford reduction is
    # the follow-up if this block is used on very large, high-mean activations.
    var = jnp.maximum(sumsq_c / m - mean * mean, 0.0)        # biased variance
    scale = gamma.astype(jnp.float32) * lax.rsqrt(var + eps)
    shift = beta.astype(jnp.float32) - mean * scale

    # ---- pass 2: recompute conv, fused BN FMA + LeakyReLU -------------------
    flops2 = int(2 * m_pad * kdim * cout + 4 * m_pad * cout)
    bytes2 = int((m_pad * kdim + kdim * cout) * itemsize
                 + (2 * cout + m_pad * cout) * 4)
    out2d = pl.pallas_call(
        functools.partial(_conv_bn_act_kernel, neg_slope=neg_slope),
        out_shape=jax.ShapeDtypeStruct((m_pad, cout), jnp.float32),
        grid_spec=pltpu.PrefetchScalarGridSpec(
            num_scalar_prefetch=0,
            grid=(num_tiles,),
            in_specs=[pl.BlockSpec((tile_m, kdim), lambda i: (i, 0)),
                      pl.BlockSpec((kdim, cout), lambda i: (0, 0)),
                      pl.BlockSpec((1, cout), lambda i: (0, 0)),
                      pl.BlockSpec((1, cout), lambda i: (0, 0))],
            out_specs=pl.BlockSpec((tile_m, cout), lambda i: (i, 0))),
        compiler_params=cparams,
        cost_estimate=pl.CostEstimate(flops=flops2, transcendentals=0,
                                      bytes_accessed=bytes2),
    )(lhs_k, w_k, scale.reshape(1, cout), shift.reshape(1, cout))

    # ---- glue: strip row padding (if any), back to NCHW ---------------------
    out = out2d[:m].reshape(n, ho, wo, cout)
    return jnp.transpose(out, (0, 3, 1, 2))

# TODO(synk): BatchNorm running_mean/running_var buffer updates (stateful
# training bookkeeping) are not reproduced; forward output is unaffected.


def _reference(x_nchw, weight_oihw, bias, gamma, beta, *,
               stride=1, eps=1e-5, neg_slope=0.01):
    """Pure-JAX reference mirroring PyTorch semantics (bias included)."""
    k = weight_oihw.shape[2]
    pad = k // 2
    x = jnp.transpose(x_nchw, (0, 2, 3, 1)).astype(jnp.float32)
    w_hwio = jnp.transpose(weight_oihw, (2, 3, 1, 0)).astype(jnp.float32)
    conv = lax.conv_general_dilated(
        x, w_hwio, window_strides=(stride, stride),
        padding=[(pad, pad), (pad, pad)],
        dimension_numbers=("NHWC", "HWIO", "NHWC")) + bias
    mean = conv.mean(axis=(0, 1, 2))
    var = ((conv - mean) ** 2).mean(axis=(0, 1, 2))
    y = (conv - mean) * lax.rsqrt(var + eps) * gamma + beta
    y = jnp.where(y > 0, y, neg_slope * y)
    return jnp.transpose(y, (0, 3, 1, 2))


if __name__ == "__main__":
    # Shapes consistent with CBA(in_channels=4, out_channels=8, kernel_size=3)
    N, CIN, COUT, H, W, K, STRIDE = 2, 4, 8, 16, 16, 3, 1

    key = jax.random.PRNGKey(0)
    kx, kw, kb, kg, kbt = jax.random.split(key, 5)
    x = jax.random.normal(kx, (N, CIN, H, W), jnp.float32)
    weight = jax.random.normal(kw, (COUT, CIN, K, K), jnp.float32) * 0.1
    bias = jax.random.normal(kb, (COUT,), jnp.float32) * 0.1
    gamma = 1.0 + 0.1 * jax.random.normal(kg, (COUT,), jnp.float32)
    beta = 0.1 * jax.random.normal(kbt, (COUT,), jnp.float32)

    out = cba_forward(x, weight, bias, gamma, beta, stride=STRIDE)
    out = jax.block_until_ready(out)

    ref = _reference(x, weight, bias, gamma, beta, stride=STRIDE)
    assert out.shape == (N, COUT, H, W)
    assert jnp.allclose(out, ref, rtol=1e-4, atol=1e-4), \
        f"max abs err = {jnp.max(jnp.abs(out - ref))}"

    print("KERNEL_OK")
</pallas_src>

<mosaic_0001>
module attributes {stable_mosaic.version = 11 : i64} {
  func.func @_stats_kernel(%arg0: i32, %arg1: memref<256x36xf32, #tpu.memory_space<vmem>>, %arg2: memref<36x8xf32, #tpu.memory_space<vmem>>, %arg3: memref<1x2x8xf32, #tpu.memory_space<vmem>>) attributes {dimension_semantics = [#tpu.dimension_semantics<parallel>], iteration_bounds = array<i64: 2>, scalar_prefetch = 0 : i64, scratch_operands = 0 : i64, tpu.core_type = #tpu.core_type<tc>, window_params = [{transform_indices = @transform_0, window_bounds = array<i64: 256, 36>}, {pipeline_mode = #tpu.pipeline_mode<synchronous>, transform_indices = @transform_1, window_bounds = array<i64: 36, 8>}, {transform_indices = @transform_2, window_bounds = array<i64: 1, 2, 8>}]} {
    %c0 = arith.constant 0 : index
    %c0_0 = arith.constant 0 : index
    %0 = vector.load %arg1[%c0, %c0_0] : memref<256x36xf32, #tpu.memory_space<vmem>>, vector<256x36xf32>
    %c0_1 = arith.constant 0 : index
    %c0_2 = arith.constant 0 : index
    %1 = vector.load %arg2[%c0_1, %c0_2] : memref<36x8xf32, #tpu.memory_space<vmem>>, vector<36x8xf32>
    %cst = arith.constant dense<0.000000e+00> : vector<256x8xf32>
    %2 = tpu.matmul %0, %1, %cst {dimension_numbers = #tpu.dot_dimension_numbers<[1], [0], [0], [1], [0, 0, 1, 1], [], []>} : vector<256x36xf32>, vector<36x8xf32>, vector<256x8xf32> -> vector<256x8xf32>
    %cst_3 = arith.constant dense<0.000000e+00> : vector<8xf32>
    %3 = vector.multi_reduction <add>, %2, %cst_3 [0] : vector<256x8xf32> to vector<8xf32>
    %4 = vector.shape_cast %3 : vector<8xf32> to vector<1x8xf32>
    %5 = arith.mulf %2, %2 : vector<256x8xf32>
    %cst_4 = arith.constant dense<0.000000e+00> : vector<8xf32>
    %6 = vector.multi_reduction <add>, %5, %cst_4 [0] : vector<256x8xf32> to vector<8xf32>
    %7 = vector.shape_cast %6 : vector<8xf32> to vector<1x8xf32>
    %8 = tpu.concatenate %4, %7 in 0 : vector<1x8xf32>, vector<1x8xf32> -> vector<2x8xf32>
    %9 = vector.shape_cast %8 : vector<2x8xf32> to vector<1x2x8xf32>
    %c0_5 = arith.constant 0 : index
    %c0_6 = arith.constant 0 : index
    %c0_7 = arith.constant 0 : index
    %10 = vector.load %arg3[%c0_5, %c0_6, %c0_7] : memref<1x2x8xf32, #tpu.memory_space<vmem>>, vector<1x2x8xf32>
    tpu.vector_store %arg3[%c0_5, %c0_6, %c0_7], %9 {strides = array<i32>} : memref<1x2x8xf32, #tpu.memory_space<vmem>>, vector<1x2x8xf32>,
    return
  }
  func.func @transform_0(%arg0: i32) -> (i32, i32) {
    %c0_i32 = arith.constant 0 : i32
    %c0_i32_0 = arith.constant 0 : i32
    return %arg0, %c0_i32 : i32, i32
  }
  func.func @transform_1(%arg0: i32) -> (i32, i32) {
    %c0_i32 = arith.constant 0 : i32
    %c0_i32_0 = arith.constant 0 : i32
    %c0_i32_1 = arith.constant 0 : i32
    return %c0_i32, %c0_i32_0 : i32, i32
  }
  func.func @transform_2(%arg0: i32) -> (i32, i32, i32) {
    %c0_i32 = arith.constant 0 : i32
    %c0_i32_0 = arith.constant 0 : i32
    %c0_i32_1 = arith.constant 0 : i32
    return %arg0, %c0_i32, %c0_i32_0 : i32, i32, i32
  }
}

</mosaic_0001>

<llo_original>
// kernel: tpu_custom_call.1
$region0: #{tpu_custom_call.1}
  #allocation0 [shape = 'u32[]', space=smem, size = 0x4, offset = 0x4, fixed_abs, tag = 'smem constant byte address 0x4 - core index']
  #allocation1 [shape = 'u32[144,128]{1,0:T(1,128)}', space=vmem, size = 0x12000, scoped, tag = 'internal scratch']
  %s0 = inlined_call_operand.vmem [shape: f32[512,36], index: 0, kind: input, shape index: {}]
  %s1 = inlined_call_operand.vmem [shape: f32[36,8], index: 1, kind: input, shape index: {}]
  %s2 = inlined_call_operand.hbm [shape: f32[2,2,8], index: 2, kind: output, shape index: {}]
  %s3 = sld [smem:[#allocation0]]
  $region41: #{tpu_custom_call.1} parent=0
    _
  %s5 = ssub.s32 1, %s3
  %s6 = scalar_select 0, %s5, %s3
  $region1: #{tpu_custom_call.1} parent=0
    #allocation2 [shape = 'u8[2048]{0}', space=vmem, size = 0x800, scoped, tag = 'output window, operand 0']
    #allocation3 [shape = 's32[2]{0}', space=sflag, size = 0x8, scoped, tag = 'scoped memory for tpu_custom_call.1']
    %7 = vsyncpa [#allocation3], 0
    %s8 = scalar_lea.sflag [#allocation3], 1
    %9 = vsyncpa %s8, 0
    loop: start=0, step=1, limit=4
    $region2: #{tpu_custom_call.1} parent=1 // loop_pre_header
      _
    $region3: #{tpu_custom_call.1} parent=1 // loop_header
      %s11 = sphi 0, %s15
      %p12 = scmp.ge.s32.totalorder %s11, 4
      %s21 = sphi 0, %s23
      %s24 = sphi 0, %s21
      %s25 = sphi 0, %s24
      %s41 = sphi 0, %s25
      %s45 = sphi 0, %s45
      %s47 = sphi 0, %s45
      %s48 = sphi 0, %s47
      %s62 = sphi 0, %s48
      %s68 = sphi 0, %s70
      %s71 = sphi 0, %s68
      %s72 = sphi 0, %s71
      %s88 = sphi 0, %s72
    $region4: #{tpu_custom_call.1} parent=1 // loop_header_branch
      %14 = sbr.rel (%p12) target = $region8
    $region5: #{tpu_custom_call.1} parent=1 // loop_body
      %s16 = ssub.s32 %s11, 1
      %s17 = ssub.s32 %s11, 2
      %s18 = sadd.s32 %s11, 1
      %s19 = ssub.s32 %s11, %s18
      %p20 = scmp.eq.s32.totalorder %s19, 0
      %s22 = sadd.s32 %s21, 1
      %s23 = scalar_select %p20, %s21, %s22
      %p26 = pneg %p20
      %p27 = scmp.eq.s32.totalorder %s11, 1
      %p28 = por %p26, %p27
      %p29 = scmp.ne.s32.totalorder %s21, %s24
      %p30 = scmp.eq.s32.totalorder %s11, 0
      %p31 = por %p29, %p30
      %p32 = scmp.ne.s32.totalorder %s21, %s24
      %p33 = scmp.eq.s32.totalorder %s16, 1
      %p34 = por %p32, %p33
      %p35 = scmp.ne.s32.totalorder %s24, %s25
      %p36 = scmp.eq.s32.totalorder %s16, 0
      %p37 = por %p35, %p36
      %p38 = scmp.ne.s32.totalorder %s24, %s25
      %p39 = scmp.eq.s32.totalorder %s17, 1
      %p40 = por %p38, %p39
      %p42 = scmp.ne.s32.totalorder %s25, %s41
      %p43 = scmp.eq.s32.totalorder %s17, 0
      %p44 = por %p42, %p43
      %s46 = sadd.s32 %s45, 1
      %p49 = scmp.eq.s32.totalorder %s11, 1
      %p50 = scmp.ne.s32.totalorder %s45, %s47
      %p51 = scmp.eq.s32.totalorder %s11, 0
      %p52 = por %p50, %p51
      %p53 = scmp.ne.s32.totalorder %s45, %s47
      %p54 = scmp.eq.s32.totalorder %s16, 1
      %p55 = por %p53, %p54
      %p56 = scmp.ne.s32.totalorder %s47, %s48
      %p57 = scmp.eq.s32.totalorder %s16, 0
      %p58 = por %p56, %p57
      %p59 = scmp.ne.s32.totalorder %s47, %s48
      %p60 = scmp.eq.s32.totalorder %s17, 1
      %p61 = por %p59, %p60
      %p63 = scmp.ne.s32.totalorder %s48, %s62
      %p64 = scmp.eq.s32.totalorder %s17, 0
      %p65 = por %p63, %p64
      %s66 = ssub.s32 %s11, %s18
      %p67 = scmp.eq.s32.totalorder %s66, 0
      %s69 = sadd.s32 %s68, 1
      %s70 = scalar_select %p67, %s68, %s69
      %p73 = pneg %p67
      %p74 = scmp.eq.s32.totalorder %s11, 1
      %p75 = por %p73, %p74
      %p76 = scmp.ne.s32.totalorder %s68, %s71
      %p77 = scmp.eq.s32.totalorder %s11, 0
      %p78 = por %p76, %p77
      %p79 = scmp.ne.s32.totalorder %s68, %s71
      %p80 = scmp.eq.s32.totalorder %s16, 1
      %p81 = por %p79, %p80
      %p82 = scmp.ne.s32.totalorder %s71, %s72
      %p83 = scmp.eq.s32.totalorder %s16, 0
      %p84 = por %p82, %p83
      %p85 = scmp.ne.s32.totalorder %s71, %s72
      %p86 = scmp.eq.s32.totalorder %s17, 1
      %p87 = por %p85, %p86
      %p89 = scmp.ne.s32.totalorder %s72, %s88
      %p90 = scmp.eq.s32.totalorder %s17, 0
      %p91 = por %p89, %p90
      %p92 = scmp.le.s32.totalorder 1, %s11
      %p93 = scmp.lt.s32.totalorder %s11, 3
      %p94 = pnand %p92, %p93
      %p95 = pneg %p94
      // Predicated region
      $region9: #{tpu_custom_call.1} parent=5 // pred_check
        _
      $region10: #{tpu_custom_call.1} parent=5 // pred_check_branch
        %97 = sbr.rel (%p94) target = $region12
      $region11: #{tpu_custom_call.1} parent=5 // pred_region
        %s98 = ssub.s32 %s11, 1
        // Predicated region
        $region13: #{tpu_custom_call.1} parent=11 // pred_check
          %p99 = pneg %p58
        $region14: #{tpu_custom_call.1} parent=11 // pred_check_branch
          %101 = sbr.rel (%p99) target = $region16
        $region15: #{tpu_custom_call.1} parent=11 // pred_region
          _
        $region16: #{tpu_custom_call.1} parent=11 // pred_fallthru
          _
      $region12: #{tpu_custom_call.1} parent=5 // pred_fallthru
        _
      %p102 = scmp.lt.s32.totalorder %s11, 2
      // Predicated region
      $region17: #{tpu_custom_call.1} parent=5 // pred_check
        %p103 = pneg %p102
      $region18: #{tpu_custom_call.1} parent=5 // pred_check_branch
        %105 = sbr.rel (%p103) target = $region20
      $region19: #{tpu_custom_call.1} parent=5 // pred_region
        // Predicated region
        $region21: #{tpu_custom_call.1} parent=19 // pred_check
          %p106 = pneg %p31
        $region22: #{tpu_custom_call.1} parent=19 // pred_check_branch
          %108 = sbr.rel (%p106) target = $region24
        $region23: #{tpu_custom_call.1} parent=19 // pred_region
          %s109 = smul.u32 32, %s11
          %p110 = scmp.lt.s32.totalorder %s109, 63
          %s111 = scalar_select %p110, %s109, 63
          %s112 = smul.addr %s111, 8
          %s113 = scalar_lea.vmem %s0, %s112
          %s114 = smul.u32 32, %s11
        $region24: #{tpu_custom_call.1} parent=19 // pred_fallthru
          _
      $region20: #{tpu_custom_call.1} parent=5 // pred_fallthru
        _
      %p115 = scmp.le.s32.totalorder 1, %s11
      %p116 = scmp.lt.s32.totalorder %s11, 3
      %p117 = pnand %p115, %p116
      %p118 = pneg %p117
      // Predicated region
      $region25: #{tpu_custom_call.1} parent=5 // pred_check
        _
      $region26: #{tpu_custom_call.1} parent=5 // pred_check_branch
        %120 = sbr.rel (%p117) target = $region28
      $region27: #{tpu_custom_call.1} parent=5 // pred_region
        %s121 = ssub.s32 %s11, 1
        %s122 = smul.u32 32, %s16
        %p123 = scmp.lt.s32.totalorder %s122, 63
        %s124 = scalar_select %p123, %s122, 63
        %s125 = smul.addr %s124, 8
        %s126 = scalar_lea.vmem %s0, %s125
        %p127 = pneg %p37
        %p128 = pneg %p34
        %p129 = pneg %p58
        %p130 = pneg %p55
        %p131 = pneg %p84
        %p132 = pneg %p81
        %s133 = sand.u32 %s71, 1
        %s134 = scalar_lea.sflag [#allocation3], %s133
        %s135 = sand.u32 %s71, 1
        %s136 = smul.addr %s135, 2
        %s137 = scalar_lea.vmem [#allocation2], %s136
        %s138 = smul.u32 32, %s16
        %p139 = scmp.lt.s32.totalorder %s138, 63
        %s140 = scalar_select %p139, %s138, 63
        %s141 = smul.addr %s140, 8
        %s142 = scalar_lea.vmem %s0, %s141
        %s143 = smul.u32 32, %s16
        %v144 = vld [vmem:[%s142] sm:$0xff]
        %v145 = vld [vmem:[%s142 + $0x8] sm:$0xff]
        %v146 = vld [vmem:[%s142 + $0x10] sm:$0xff]
        %v147 = vld [vmem:[%s142 + $0x18] sm:$0xff]
        %v148 = vld [vmem:[%s142 + $0x20] sm:$0xff]
        %v149 = vld [vmem:[%s142 + $0x28] sm:$0xff]
        %v150 = vld [vmem:[%s142 + $0x30] sm:$0xff]
        %v151 = vld [vmem:[%s142 + $0x38] sm:$0xff]
        %v152 = vld [vmem:[%s142 + $0x40] sm:$0xff]
        %v153 = vld [vmem:[%s142 + $0x48] sm:$0xff]
        %v154 = vld [vmem:[%s142 + $0x50] sm:$0xff]
        %v155 = vld [vmem:[%s142 + $0x58] sm:$0xff]
        %v156 = vld [vmem:[%s142 + $0x60] sm:$0xff]
        %v157 = vld [vmem:[%s142 + $0x68] sm:$0xff]
        %v158 = vld [vmem:[%s142 + $0x70] sm:$0xff]
        %v159 = vld [vmem:[%s142 + $0x78] sm:$0xff]
        %v160 = vld [vmem:[%s142 + $0x80] sm:$0xff]
        %v161 = vld [vmem:[%s142 + $0x88] sm:$0xff]
        %v162 = vld [vmem:[%s142 + $0x90] sm:$0xff]
        %v163 = vld [vmem:[%s142 + $0x98] sm:$0xff]
        %v164 = vld [vmem:[%s142 + $0xa0] sm:$0xff]
        %v165 = vld [vmem:[%s142 + $0xa8] sm:$0xff]
        %v166 = vld [vmem:[%s142 + $0xb0] sm:$0xff]
        %v167 = vld [vmem:[%s142 + $0xb8] sm:$0xff]
        %v168 = vld [vmem:[%s142 + $0xc0] sm:$0xff]
        %v169 = vld [vmem:[%s142 + $0xc8] sm:$0xff]
        %v170 = vld [vmem:[%s142 + $0xd0] sm:$0xff]
        %v171 = vld [vmem:[%s142 + $0xd8] sm:$0xff]
        %v172 = vld [vmem:[%s142 + $0xe0] sm:$0xff]
        %v173 = vld [vmem:[%s142 + $0xe8] sm:$0xff]
        %v174 = vld [vmem:[%s142 + $0xf0] sm:$0xff]
        %v175 = vld [vmem:[%s142 + $0xf8] sm:$0xff]
        %v176 = vld [vmem:[%s1] sm:$0xff]
        %v177 = vld [vmem:[%s1 + $0x8] sm:$0xff]
        %v178 = vld [vmem:[%s1 + $0x10] sm:$0xff]
        %v179 = vld [vmem:[%s1 + $0x18] sm:$0xff]
        %v180 = vld [vmem:[%s1 + $0x20] sm:$0xf]
        %vm181 = vcmask 293888
        %v183 = vsel %vm181, %v144, 0
        %v186 = vsel %vm181, %v145, 0
        %v189 = vsel %vm181, %v146, 0
        %v192 = vsel %vm181, %v147, 0
        %v195 = vsel %vm181, %v148, 0
        %v198 = vsel %vm181, %v149, 0
        %v201 = vsel %vm181, %v150, 0
        %v204 = vsel %vm181, %v151, 0
        %v207 = vsel %vm181, %v152, 0
        %v210 = vsel %vm181, %v153, 0
        %v213 = vsel %vm181, %v154, 0
        %v216 = vsel %vm181, %v155, 0
        %v219 = vsel %vm181, %v156, 0
        %v222 = vsel %vm181, %v157, 0
        %v225 = vsel %vm181, %v158, 0
        %v228 = vsel %vm181, %v159, 0
        %v231 = vsel %vm181, %v160, 0
        %v234 = vsel %vm181, %v161, 0
        %v237 = vsel %vm181, %v162, 0
        %v240 = vsel %vm181, %v163, 0
        %v243 = vsel %vm181, %v164, 0
        %v246 = vsel %vm181, %v165, 0
        %v249 = vsel %vm181, %v166, 0
        %v252 = vsel %vm181, %v167, 0
        %v255 = vsel %vm181, %v168, 0
        %v258 = vsel %vm181, %v169, 0
        %v261 = vsel %vm181, %v170, 0
        %v264 = vsel %vm181, %v171, 0
        %v267 = vsel %vm181, %v172, 0
        %v270 = vsel %vm181, %v173, 0
        %v273 = vsel %vm181, %v174, 0
        %v276 = vsel %vm181, %v175, 0
        %vm278 = vcmask 1043456
        %v280 = vsel %vm278, %v180, 0
        %282 = vmatprep.subr.mxu0 0.0
        %283 = vmatpush1.msra.mxu0 %v176
        %284 = vmatprep.subr.mxu0 0.0
        %285 = vmatpush1.msra.mxu0 %v177
        %286 = vmatprep.subr.mxu0 0.0
        %287 = vmatpush1.msra.mxu0 %v178
        %288 = vmatprep.subr.mxu0 0.0
        %289 = vmatpush1.msra.mxu0 %v179
        %290 = vmatprep.subr.mxu0 0.0
        %291 = vmatpush1.msra.mxu0 %v280
        %292 = vmatprep.subr.mxu0 0.0
        %293 = vmatpush1.msra.mxu0 0.0
        %294 = vmatprep.subr.mxu0 0.0
        %295 = vmatpush1.msra.mxu0 0.0
        %296 = vmatprep.subr.mxu0 0.0
        %297 = vmatpush1.msra.mxu0 0.0
        %298 = vmatprep.subr.mxu0 0.0
        %299 = vmatpush1.msra.mxu0 0.0
        %300 = vmatprep.subr.mxu0 0.0
        %301 = vmatpush1.msra.mxu0 0.0
        %302 = vmatprep.subr.mxu0 0.0
        %303 = vmatpush1.msra.mxu0 0.0
        %304 = vmatprep.subr.mxu0 0.0
        %305 = vmatpush1.msra.mxu0 0.0
        %306 = vmatprep.subr.mxu0 0.0
        %307 = vmatpush1.msra.mxu0 0.0
        %308 = vmatprep.subr.mxu0 0.0
        %309 = vmatpush1.msra.mxu0 0.0
        %310 = vmatprep.subr.mxu0 0.0
        %311 = vmatpush1.msra.mxu0 0.0
        %312 = vmatprep.subr.mxu0 0.0
        %313 = vmatpush1.msra.mxu0 0.0
        %314 = vmatprep.subr.mxu0 0.0
        %315 = vmatpush1.msra.mxu0 0.0
        %316 = vmatprep.subr.mxu0 0.0
        %317 = vmatpush1.msra.mxu0 0.0
        %318 = vmatprep.subr.mxu0 0.0
        %319 = vmatpush1.msra.mxu0 0.0
        %320 = vmatprep.subr.mxu0 0.0
        %321 = vmatpush1.msra.mxu0 0.0
        %322 = vmatprep.subr.mxu0 0.0
        %323 = vmatpush1.msra.mxu0 0.0
        %324 = vmatprep.subr.mxu0 0.0
        %325 = vmatpush1.msra.mxu0 0.0
        %326 = vmatprep.subr.mxu0 0.0
        %327 = vmatpush1.msra.mxu0 0.0
        %328 = vmatprep.subr.mxu0 0.0
        %329 = vmatpush1.msra.mxu0 0.0
        %330 = vmatprep.subr.mxu0 0.0
        %331 = vmatpush1.msra.mxu0 0.0
        %332 = vmatprep.subr.mxu0 0.0
        %333 = vmatpush1.msra.mxu0 0.0
        %334 = vmatprep.subr.mxu0 0.0
        %335 = vmatpush1.msra.mxu0 0.0
        %336 = vmatprep.subr.mxu0 0.0
        %337 = vmatpush1.msra.mxu0 0.0
        %338 = vmatprep.subr.mxu0 0.0
        %339 = vmatpush1.msra.mxu0 0.0
        %340 = vmatprep.subr.mxu0 0.0
        %341 = vmatpush1.msra.mxu0 0.0
        %342 = vmatprep.subr.mxu0 0.0
        %343 = vmatpush1.msra.mxu0 0.0
        %344 = vmatprep.subr.mxu0 0.0
        %345 = vmatpush1.msra.mxu0 0.0
        %346 = vmatprep.mubr.f32.mxu0 0.0
        %347 = vmatmul.mubr.f32.gmra.mrb[0].mxu0 %v183
        %v348 = vpop.f32.mrb[0].mxu0
        %v349 = vadd.f32 0.0, %v348
        %v350 = vpop.f32.mrb[0].mxu0
        %351 = vmatprep.mubr.f32.mxu0 0.0
        %352 = vmatmul.mubr.f32.gmra.mrb[0].mxu0 %v186
        %v353 = vpop.f32.mrb[0].mxu0
        %v354 = vadd.f32 0.0, %v353
        %v355 = vpop.f32.mrb[0].mxu0
        %356 = vmatprep.mubr.f32.mxu0 0.0
        %357 = vmatmul.mubr.f32.gmra.mrb[0].mxu0 %v189
        %v358 = vpop.f32.mrb[0].mxu0
        %v359 = vadd.f32 0.0, %v358
        %v360 = vpop.f32.mrb[0].mxu0
        %361 = vmatprep.mubr.f32.mxu0 0.0
        %362 = vmatmul.mubr.f32.gmra.mrb[0].mxu0 %v192
        %v363 = vpop.f32.mrb[0].mxu0
        %v364 = vadd.f32 0.0, %v363
        %v365 = vpop.f32.mrb[0].mxu0
        %366 = vmatprep.mubr.f32.mxu0 0.0
        %367 = vmatmul.mubr.f32.gmra.mrb[0].mxu0 %v195
        %v368 = vpop.f32.mrb[0].mxu0
        %v369 = vadd.f32 0.0, %v368
        %v370 = vpop.f32.mrb[0].mxu0
        %371 = vmatprep.mubr.f32.mxu0 0.0
        %372 = vmatmul.mubr.f32.gmra.mrb[0].mxu0 %v198
        %v373 = vpop.f32.mrb[0].mxu0
        %v374 = vadd.f32 0.0, %v373
        %v375 = vpop.f32.mrb[0].mxu0
        %376 = vmatprep.mubr.f32.mxu0 0.0
        %377 = vmatmul.mubr.f32.gmra.mrb[0].mxu0 %v201
        %v378 = vpop.f32.mrb[0].mxu0
        %v379 = vadd.f32 0.0, %v378
        %v380 = vpop.f32.mrb[0].mxu0
        %381 = vmatprep.mubr.f32.mxu0 0.0
        %382 = vmatmul.mubr.f32.gmra.mrb[0].mxu0 %v204
        %v383 = vpop.f32.mrb[0].mxu0
        %v384 = vadd.f32 0.0, %v383
        %v385 = vpop.f32.mrb[0].mxu0
        %386 = vmatprep.mubr.f32.mxu0 0.0
        %387 = vmatmul.mubr.f32.gmra.mrb[0].mxu0 %v207
        %v388 = vpop.f32.mrb[0].mxu0
        %v389 = vadd.f32 0.0, %v388
        %v390 = vpop.f32.mrb[0].mxu0
        %391 = vmatprep.mubr.f32.mxu0 0.0
        %392 = vmatmul.mubr.f32.gmra.mrb[0].mxu0 %v210
        %v393 = vpop.f32.mrb[0].mxu0
        %v394 = vadd.f32 0.0, %v393
        %v395 = vpop.f32.mrb[0].mxu0
        %396 = vmatprep.mubr.f32.mxu0 0.0
        %397 = vmatmul.mubr.f32.gmra.mrb[0].mxu0 %v213
        %v398 = vpop.f32.mrb[0].mxu0
        %v399 = vadd.f32 0.0, %v398
        %v400 = vpop.f32.mrb[0].mxu0
        %401 = vmatprep.mubr.f32.mxu0 0.0
        %402 = vmatmul.mubr.f32.gmra.mrb[0].mxu0 %v216
        %v403 = vpop.f32.mrb[0].mxu0
        %v404 = vadd.f32 0.0, %v403
        %v405 = vpop.f32.mrb[0].mxu0
        %406 = vmatprep.mubr.f32.mxu0 0.0
        %407 = vmatmul.mubr.f32.gmra.mrb[0].mxu0 %v219
        %v408 = vpop.f32.mrb[0].mxu0
        %v409 = vadd.f32 0.0, %v408
        %v410 = vpop.f32.mrb[0].mxu0
        %411 = vmatprep.mubr.f32.mxu0 0.0
        %412 = vmatmul.mubr.f32.gmra.mrb[0].mxu0 %v222
        %v413 = vpop.f32.mrb[0].mxu0
        %v414 = vadd.f32 0.0, %v413
        %v415 = vpop.f32.mrb[0].mxu0
        %416 = vmatprep.mubr.f32.mxu0 0.0
        %417 = vmatmul.mubr.f32.gmra.mrb[0].mxu0 %v225
        %v418 = vpop.f32.mrb[0].mxu0
        %v419 = vadd.f32 0.0, %v418
        %v420 = vpop.f32.mrb[0].mxu0
        %421 = vmatprep.mubr.f32.mxu0 0.0
        %422 = vmatmul.mubr.f32.gmra.mrb[0].mxu0 %v228
        %v423 = vpop.f32.mrb[0].mxu0
        %v424 = vadd.f32 0.0, %v423
        %v425 = vpop.f32.mrb[0].mxu0
        %426 = vmatprep.mubr.f32.mxu0 0.0
        %427 = vmatmul.mubr.f32.gmra.mrb[0].mxu0 %v231
        %v428 = vpop.f32.mrb[0].mxu0
        %v429 = vadd.f32 0.0, %v428
        %v430 = vpop.f32.mrb[0].mxu0
        %431 = vmatprep.mubr.f32.mxu0 0.0
        %432 = vmatmul.mubr.f32.gmra.mrb[0].mxu0 %v234
        %v433 = vpop.f32.mrb[0].mxu0
        %v434 = vadd.f32 0.0, %v433
        %v435 = vpop.f32.mrb[0].mxu0
        %436 = vmatprep.mubr.f32.mxu0 0.0
        %437 = vmatmul.mubr.f32.gmra.mrb[0].mxu0 %v237
        %v438 = vpop.f32.mrb[0].mxu0
        %v439 = vadd.f32 0.0, %v438
        %v440 = vpop.f32.mrb[0].mxu0
        %441 = vmatprep.mubr.f32.mxu0 0.0
        %442 = vmatmul.mubr.f32.gmra.mrb[0].mxu0 %v240
        %v443 = vpop.f32.mrb[0].mxu0
        %v444 = vadd.f32 0.0, %v443
        %v445 = vpop.f32.mrb[0].mxu0
        %446 = vmatprep.mubr.f32.mxu0 0.0
        %447 = vmatmul.mubr.f32.gmra.mrb[0].mxu0 %v243
        %v448 = vpop.f32.mrb[0].mxu0
        %v449 = vadd.f32 0.0, %v448
        %v450 = vpop.f32.mrb[0].mxu0
        %451 = vmatprep.mubr.f32.mxu0 0.0
        %452 = vmatmul.mubr.f32.gmra.mrb[0].mxu0 %v246
        %v453 = vpop.f32.mrb[0].mxu0
        %v454 = vadd.f32 0.0, %v453
        %v455 = vpop.f32.mrb[0].mxu0
        %456 = vmatprep.mubr.f32.mxu0 0.0
        %457 = vmatmul.mubr.f32.gmra.mrb[0].mxu0 %v249
        %v458 = vpop.f32.mrb[0].mxu0
        %v459 = vadd.f32 0.0, %v458
        %v460 = vpop.f32.mrb[0].mxu0
        %461 = vmatprep.mubr.f32.mxu0 0.0
        %462 = vmatmul.mubr.f32.gmra.mrb[0].mxu0 %v252
        %v463 = vpop.f32.mrb[0].mxu0
        %v464 = vadd.f32 0.0, %v463
        %v465 = vpop.f32.mrb[0].mxu0
        %466 = vmatprep.mubr.f32.mxu0 0.0
        %467 = vmatmul.mubr.f32.gmra.mrb[0].mxu0 %v255
        %v468 = vpop.f32.mrb[0].mxu0
        %v469 = vadd.f32 0.0, %v468
        %v470 = vpop.f32.mrb[0].mxu0
        %471 = vmatprep.mubr.f32.mxu0 0.0
        %472 = vmatmul.mubr.f32.gmra.mrb[0].mxu0 %v258
        %v473 = vpop.f32.mrb[0].mxu0
        %v474 = vadd.f32 0.0, %v473
        %v475 = vpop.f32.mrb[0].mxu0
        %476 = vmatprep.mubr.f32.mxu0 0.0
        %477 = vmatmul.mubr.f32.gmra.mrb[0].mxu0 %v261
        %v478 = vpop.f32.mrb[0].mxu0
        %v479 = vadd.f32 0.0, %v478
        %v480 = vpop.f32.mrb[0].mxu0
        %481 = vmatprep.mubr.f32.mxu0 0.0
        %482 = vmatmul.mubr.f32.gmra.mrb[0].mxu0 %v264
        %v483 = vpop.f32.mrb[0].mxu0
        %v484 = vadd.f32 0.0, %v483
        %v485 = vpop.f32.mrb[0].mxu0
        %486 = vmatprep.mubr.f32.mxu0 0.0
        %487 = vmatmul.mubr.f32.gmra.mrb[0].mxu0 %v267
        %v488 = vpop.f32.mrb[0].mxu0
        %v489 = vadd.f32 0.0, %v488
        %v490 = vpop.f32.mrb[0].mxu0
        %491 = vmatprep.mubr.f32.mxu0 0.0
        %492 = vmatmul.mubr.f32.gmra.mrb[0].mxu0 %v270
        %v493 = vpop.f32.mrb[0].mxu0
        %v494 = vadd.f32 0.0, %v493
        %v495 = vpop.f32.mrb[0].mxu0
        %496 = vmatprep.mubr.f32.mxu0 0.0
        %497 = vmatmul.mubr.f32.gmra.mrb[0].mxu0 %v273
        %v498 = vpop.f32.mrb[0].mxu0
        %v499 = vadd.f32 0.0, %v498
        %v500 = vpop.f32.mrb[0].mxu0
        %501 = vmatprep.mubr.f32.mxu0 0.0
        %502 = vmatmul.mubr.f32.gmra.mrb[0].mxu0 %v276
        %v503 = vpop.f32.mrb[0].mxu0
        %v504 = vadd.f32 0.0, %v503
        %v505 = vpop.f32.mrb[0].mxu0
        %506 = vdwg.mxu0
        %vm507 = vcmask 64512
        %v508 = vsel %vm507, %v349, 0.0
        %v509 = vsel %vm507, %v354, 0.0
        %v510 = vadd.f32 %v508, %v509
        %v511 = vsel %vm507, %v359, 0.0
        %v512 = vadd.f32 %v510, %v511
        %v513 = vsel %vm507, %v364, 0.0
        %v514 = vadd.f32 %v512, %v513
        %v515 = vsel %vm507, %v369, 0.0
        %v516 = vadd.f32 %v514, %v515
        %v517 = vsel %vm507, %v374, 0.0
        %v518 = vadd.f32 %v516, %v517
        %v519 = vsel %vm507, %v379, 0.0
        %v520 = vadd.f32 %v518, %v519
        %v521 = vsel %vm507, %v384, 0.0
        %v522 = vadd.f32 %v520, %v521
        %v523 = vsel %vm507, %v389, 0.0
        %v524 = vadd.f32 %v522, %v523
        %v525 = vsel %vm507, %v394, 0.0
        %v526 = vadd.f32 %v524, %v525
        %v527 = vsel %vm507, %v399, 0.0
        %v528 = vadd.f32 %v526, %v527
        %v529 = vsel %vm507, %v404, 0.0
        %v530 = vadd.f32 %v528, %v529
        %v531 = vsel %vm507, %v409, 0.0
        %v532 = vadd.f32 %v530, %v531
        %v533 = vsel %vm507, %v414, 0.0
        %v534 = vadd.f32 %v532, %v533
        %v535 = vsel %vm507, %v419, 0.0
        %v536 = vadd.f32 %v534, %v535
        %v537 = vsel %vm507, %v424, 0.0
        %v538 = vadd.f32 %v536, %v537
        %v539 = vsel %vm507, %v429, 0.0
        %v540 = vadd.f32 %v538, %v539
        %v541 = vsel %vm507, %v434, 0.0
        %v542 = vadd.f32 %v540, %v541
        %v543 = vsel %vm507, %v439, 0.0
        %v544 = vadd.f32 %v542, %v543
        %v545 = vsel %vm507, %v444, 0.0
        %v546 = vadd.f32 %v544, %v545
        %v547 = vsel %vm507, %v449, 0.0
        %v548 = vadd.f32 %v546, %v547
        %v549 = vsel %vm507, %v454, 0.0
        %v550 = vadd.f32 %v548, %v549
        %v551 = vsel %vm507, %v459, 0.0
        %v552 = vadd.f32 %v550, %v551
        %v553 = vsel %vm507, %v464, 0.0
        %v554 = vadd.f32 %v552, %v553
        %v555 = vsel %vm507, %v469, 0.0
        %v556 = vadd.f32 %v554, %v555
        %v557 = vsel %vm507, %v474, 0.0
        %v558 = vadd.f32 %v556, %v557
        %v559 = vsel %vm507, %v479, 0.0
        %v560 = vadd.f32 %v558, %v559
        %v561 = vsel %vm507, %v484, 0.0
        %v562 = vadd.f32 %v560, %v561
        %v563 = vsel %vm507, %v489, 0.0
        %v564 = vadd.f32 %v562, %v563
        %v565 = vsel %vm507, %v494, 0.0
        %v566 = vadd.f32 %v564, %v565
        %v567 = vsel %vm507, %v499, 0.0
        %v568 = vadd.f32 %v566, %v567
        %v569 = vsel %vm507, %v504, 0.0
        %v570 = vadd.f32 %v568, %v569
        %v571 = vrot.slane %v570, 4
        %v572 = vadd.f32 %v570, %v571
        %v573 = vrot.slane %v572, 2
        %v574 = vadd.f32 %v572, %v573
        %v575 = vrot.slane %v574, 1
        %v576 = vadd.f32 %v574, %v575
        %v577 = vmul.f32 %v349, %v349
        %v578 = vmul.f32 %v354, %v354
        %v579 = vmul.f32 %v359, %v359
        %v580 = vmul.f32 %v364, %v364
        %v581 = vmul.f32 %v369, %v369
        %v582 = vmul.f32 %v374, %v374
        %v583 = vmul.f32 %v379, %v379
        %v584 = vmul.f32 %v384, %v384
        %v585 = vmul.f32 %v389, %v389
        %v586 = vmul.f32 %v394, %v394
        %v587 = vmul.f32 %v399, %v399
        %v588 = vmul.f32 %v404, %v404
        %v589 = vmul.f32 %v409, %v409
        %v590 = vmul.f32 %v414, %v414
        %v591 = vmul.f32 %v419, %v419
        %v592 = vmul.f32 %v424, %v424
        %v593 = vmul.f32 %v429, %v429
        %v594 = vmul.f32 %v434, %v434
        %v595 = vmul.f32 %v439, %v439
        %v596 = vmul.f32 %v444, %v444
        %v597 = vmul.f32 %v449, %v449
        %v598 = vmul.f32 %v454, %v454
        %v599 = vmul.f32 %v459, %v459
        %v600 = vmul.f32 %v464, %v464
        %v601 = vmul.f32 %v469, %v469
        %v602 = vmul.f32 %v474, %v474
        %v603 = vmul.f32 %v479, %v479
        %v604 = vmul.f32 %v484, %v484
        %v605 = vmul.f32 %v489, %v489
        %v606 = vmul.f32 %v494, %v494
        %v607 = vmul.f32 %v499, %v499
        %v608 = vmul.f32 %v504, %v504
        %v609 = vsel %vm507, %v577, 0.0
        %v610 = vsel %vm507, %v578, 0.0
        %v611 = vadd.f32 %v609, %v610
        %v612 = vsel %vm507, %v579, 0.0
        %v613 = vadd.f32 %v611, %v612
        %v614 = vsel %vm507, %v580, 0.0
        %v615 = vadd.f32 %v613, %v614
        %v616 = vsel %vm507, %v581, 0.0
        %v617 = vadd.f32 %v615, %v616
        %v618 = vsel %vm507, %v582, 0.0
        %v619 = vadd.f32 %v617, %v618
        %v620 = vsel %vm507, %v583, 0.0
        %v621 = vadd.f32 %v619, %v620
        %v622 = vsel %vm507, %v584, 0.0
        %v623 = vadd.f32 %v621, %v622
        %v624 = vsel %vm507, %v585, 0.0
        %v625 = vadd.f32 %v623, %v624
        %v626 = vsel %vm507, %v586, 0.0
        %v627 = vadd.f32 %v625, %v626
        %v628 = vsel %vm507, %v587, 0.0
        %v629 = vadd.f32 %v627, %v628
        %v630 = vsel %vm507, %v588, 0.0
        %v631 = vadd.f32 %v629, %v630
        %v632 = vsel %vm507, %v589, 0.0
        %v633 = vadd.f32 %v631, %v632
        %v634 = vsel %vm507, %v590, 0.0
        %v635 = vadd.f32 %v633, %v634
        %v636 = vsel %vm507, %v591, 0.0
        %v637 = vadd.f32 %v635, %v636
        %v638 = vsel %vm507, %v592, 0.0
        %v639 = vadd.f32 %v637, %v638
        %v640 = vsel %vm507, %v593, 0.0
        %v641 = vadd.f32 %v639, %v640
        %v642 = vsel %vm507, %v594, 0.0
        %v643 = vadd.f32 %v641, %v642
        %v644 = vsel %vm507, %v595, 0.0
        %v645 = vadd.f32 %v643, %v644
        %v646 = vsel %vm507, %v596, 0.0
        %v647 = vadd.f32 %v645, %v646
        %v648 = vsel %vm507, %v597, 0.0
        %v649 = vadd.f32 %v647, %v648
        %v650 = vsel %vm507, %v598, 0.0
        %v651 = vadd.f32 %v649, %v650
        %v652 = vsel %vm507, %v599, 0.0
        %v653 = vadd.f32 %v651, %v652
        %v654 = vsel %vm507, %v600, 0.0
        %v655 = vadd.f32 %v653, %v654
        %v656 = vsel %vm507, %v601, 0.0
        %v657 = vadd.f32 %v655, %v656
        %v658 = vsel %vm507, %v602, 0.0
        %v659 = vadd.f32 %v657, %v658
        %v660 = vsel %vm507, %v603, 0.0
        %v661 = vadd.f32 %v659, %v660
        %v662 = vsel %vm507, %v604, 0.0
        %v663 = vadd.f32 %v661, %v662
        %v664 = vsel %vm507, %v605, 0.0
        %v665 = vadd.f32 %v663, %v664
        %v666 = vsel %vm507, %v606, 0.0
        %v667 = vadd.f32 %v665, %v666
        %v668 = vsel %vm507, %v607, 0.0
        %v669 = vadd.f32 %v667, %v668
        %v670 = vsel %vm507, %v608, 0.0
        %v671 = vadd.f32 %v669, %v670
        %v672 = vrot.slane %v671, 4
        %v673 = vadd.f32 %v671, %v672
        %v674 = vrot.slane %v673, 2
        %v675 = vadd.f32 %v673, %v674
        %v676 = vrot.slane %v675, 1
        %v677 = vadd.f32 %v675, %v676
        %vm678 = vcmask 1040384
        %v679 = vsel %vm678, %v576, %v677
        %vm680 = vcmask 58368
        %681 = vst.msk [vmem:[%s137] sm:$0x3] %vm680, %v679
        %s682 = sand.u32 %s71, 1
        %s683 = scalar_lea.sflag [#allocation3], %s682
        %s684 = sand.u32 %s71, 1
        %s685 = smul.addr %s684, 2
        %s686 = scalar_lea.vmem [#allocation2], %s685
        // Predicated region
        $region29: #{tpu_custom_call.1} parent=27 // pred_check
          %p687 = pneg %p81
        $region30: #{tpu_custom_call.1} parent=27 // pred_check_branch
          %689 = sbr.rel (%p687) target = $region32
        $region31: #{tpu_custom_call.1} parent=27 // pred_region
          %s691 = ssub.s32 32, 32
          %692 = vsyncadd %s683, %s691
          %s693 = smul.addr %s16, 32
          %s694 = scalar_lea.hbm %s2, %s693
          %s696 = sshll.u32 %s686, 4
          %s697 = int_to_ptr.vmem [resolvable:$true] %s696
          %699 = dma.vmem_to_hbm [thread:$0]  %s697, 32, %s694, %s683
        $region32: #{tpu_custom_call.1} parent=27 // pred_fallthru
          _
      $region28: #{tpu_custom_call.1} parent=5 // pred_fallthru
        _
      %p700 = scmp.le.s32.totalorder 2, %s11
      // Predicated region
      $region33: #{tpu_custom_call.1} parent=5 // pred_check
        %p701 = pneg %p700
      $region34: #{tpu_custom_call.1} parent=5 // pred_check_branch
        %703 = sbr.rel (%p701) target = $region36
      $region35: #{tpu_custom_call.1} parent=5 // pred_region
        %s704 = ssub.s32 %s11, 2
        // Predicated region
        $region37: #{tpu_custom_call.1} parent=35 // pred_check
          %p705 = pneg %p87
        $region38: #{tpu_custom_call.1} parent=35 // pred_check_branch
          %707 = sbr.rel (%p705) target = $region40
        $region39: #{tpu_custom_call.1} parent=35 // pred_region
          %s708 = sand.u32 %s72, 1
          %s709 = scalar_lea.sflag [#allocation3], %s708
          %s710 = sand.u32 %s72, 1
          %s711 = smul.addr %s710, 2
          %s712 = scalar_lea.vmem [#allocation2], %s711
          %713 = dma.done %s709, 32
        $region40: #{tpu_custom_call.1} parent=35 // pred_fallthru
          _
      $region36: #{tpu_custom_call.1} parent=5 // pred_fallthru
        _
    $region6: #{tpu_custom_call.1} parent=1 // loop_footer
      %s15 = sadd.s32 1, %s11
    $region7: #{tpu_custom_call.1} parent=1 // loop_footer_branch
      %10 = sbr.rel target = $region3
    $region8: #{tpu_custom_call.1} parent=1 // loop_exit
      _
    %714 = vsyncpa [#allocation3], 1
    %s715 = scalar_lea.sflag [#allocation3], 1
    %716 = vsyncpa %s715, 1

</llo_original>
